<compile_context>
chip_gen: v7x
topology: tpu7x:2x2x1
jax: 0.10.0
libtpu: 0.0.40
codegen_flags: <defaults>
</compile_context>

<pallas_src>
import functools

import numpy as np

import jax
import jax.numpy as jnp
from jax.experimental import pallas as pl
from jax.experimental.pallas import tpu as pltpu


_LANES = 128
_SUBLANE_ALIGN = 32              # int8 native sublane tiling; also fine for f32
_MAX_TILE_ROWS = 2048            # 2048x128 f32 plane = 1 MiB
_VMEM_BUDGET = 24 * 1024 * 1024  # planes x 2 buffers stays under the 32 MiB scope
_MIN_TILES_FOR_SPLIT = 2         # let both v7x TensorCores get work
_SMALL_FALLBACK_ELEMS = 64 * 1024


def _ceil_div(a, b):
    return -(-a // b)


def _round_up(a, b):
    return _ceil_div(a, b) * b


@functools.lru_cache(maxsize=None)
def _vmem_limit_bytes():
    # 32 MiB is safe on every generation (raises v5e's 16 MiB scoped default,
    # equals the v6e/v7x defaults).  v5e/v6e have 128 MiB physical VMEM, so a
    # little extra headroom is allowed there; v7x (64 MiB/TC) stays at 32 MiB.
    try:
        phys = pltpu.get_tpu_info().vmem_capacity_bytes
    except Exception:  # interpret mode / unexpected runtime: stay conservative
        phys = 0
    return 48 * 1024 * 1024 if phys >= 128 * 1024 * 1024 else 32 * 1024 * 1024


# ----------------------------------------------------------------------------
# Shared math (used by both the Pallas kernels and the small-size jnp fallback)
# ----------------------------------------------------------------------------
def _cmal_icdf(mu, b, tau, prob):
    """Asymmetric-Laplace inverse CDF + 'clip' negative handling.

    Single-log rewrite of the reference two-branch torch.where expression.
    tau is clipped to [1e-6, 1-1e-6] only to guard f32 saturation at the
    degenerate endpoints; elsewhere it matches the PyTorch reference.
    """
    tau = jnp.clip(tau, 1e-6, 1.0 - 1e-6)
    inv_tau = 1.0 / tau
    inv_1mt = 1.0 / (1.0 - tau)
    is_left = prob < tau
    arg = jnp.where(is_left, prob * inv_tau, (1.0 - prob) * inv_1mt)
    scale = jnp.where(is_left, b * inv_1mt, -b * inv_tau)
    # cfg.negative_sample_handling == 'clip'  ->  torch.relu
    return jnp.maximum(mu + scale * jnp.log(arg), 0.0)


def _gmm_transform(mu, sigma, eps):
    """GMM sample of the chosen component + 'clip' negative handling."""
    return jnp.maximum(mu + sigma * eps, 0.0)


# ----------------------------------------------------------------------------
# Pallas kernels
# ----------------------------------------------------------------------------
def _cmal_sample_kernel(n_dist, mu_ref, b_ref, tau_ref, choice_ref, prob_ref,
                        out_ref):
    """Fused CMAL sample.

    mu/b/tau refs: (n_dist, tile_rows, 128) f32 per-mixture parameters.
    choice ref:    (tile_rows, 128) int8    sampled mixture component.
    prob ref:      (tile_rows, 128) f32     U(0,1) draw.
    """
    choice = choice_ref[...].astype(jnp.int32)   # widen once; compares stay cheap
    mu = mu_ref[0]
    b = b_ref[0]
    tau = tau_ref[0]
    for d in range(1, n_dist):      # static unroll; selects are free VPU filler
        sel = choice == d
        mu = jnp.where(sel, mu_ref[d], mu)
        b = jnp.where(sel, b_ref[d], b)
        tau = jnp.where(sel, tau_ref[d], tau)
    out_ref[...] = _cmal_icdf(mu, b, tau, prob_ref[...])


def _gmm_sample_kernel(n_dist, mu_ref, sigma_ref, choice_ref, eps_ref, out_ref):
    """Fused GMM sample: component gather + (mu + sigma*eps) + 'clip'."""
    choice = choice_ref[...].astype(jnp.int32)
    mu = mu_ref[0]
    sigma = sigma_ref[0]
    for d in range(1, n_dist):
        sel = choice == d
        mu = jnp.where(sel, mu_ref[d], mu)
        sigma = jnp.where(sel, sigma_ref[d], sigma)
    out_ref[...] = _gmm_transform(mu, sigma, eps_ref[...])


# ----------------------------------------------------------------------------
# Launch plumbing (lane-dense [r, 128] view, partial last tile, no big pads)
# ----------------------------------------------------------------------------
def _tile_plan(r, max_rows):
    """Split the [r, 128] lane-dense view into row tiles.

    Small inputs get a single full-array tile (block == array dims: no sublane
    alignment requirement, no masked loads).  Larger inputs get 32-row-aligned
    tiles with a partial last tile, and at least _MIN_TILES_FOR_SPLIT tiles so
    both TensorCores get work on v7x.
    """
    if r <= _SUBLANE_ALIGN * _MIN_TILES_FOR_SPLIT:
        return r, 1
    target_tiles = max(_MIN_TILES_FOR_SPLIT, _ceil_div(r, max_rows))
    tile_rows = min(max_rows, _round_up(_ceil_div(r, target_tiles), _SUBLANE_ALIGN))
    return tile_rows, _ceil_div(r, tile_rows)


def _prep_stacked(x, fill, r):
    """[D, ...] -> [D, r, 128] f32; pads only to the next 128-lane multiple."""
    if x.dtype != jnp.float32:
        x = x.astype(jnp.float32)
    d = x.shape[0]
    flat = x.reshape(d, -1)
    pad = r * _LANES - flat.shape[1]
    if pad:
        flat = jnp.pad(flat, ((0, 0), (0, pad)), constant_values=fill)
    return flat.reshape(d, r, _LANES)


def _prep_flat(x, fill, r):
    """[...] -> [r, 128] (dtype preserved); pads only to the next 128 multiple."""
    flat = x.reshape(-1)
    pad = r * _LANES - flat.shape[0]
    if pad:
        flat = jnp.pad(flat, (0, pad), constant_values=fill)
    return flat.reshape(r, _LANES)


def _run_fused(kernel, stacked, flat, n_valid, out_shape, out_dtype=jnp.float32):
    """Run a fused elementwise kernel over a lane-dense [r, 128] view.

    stacked: list of (array[D, ...], pad_fill) -> kernel block (D, tile, 128) f32
    flat:    list of (array[...],  pad_fill)   -> kernel block (tile, 128), dtype kept
    """
    r = _ceil_div(n_valid, _LANES)

    # VMEM budget: (all input planes + output) x double buffering, per row.
    row_bytes = _LANES * np.dtype(out_dtype).itemsize
    for x, _ in stacked:
        row_bytes += x.shape[0] * _LANES * 4          # params streamed as f32
    for x, _ in flat:
        row_bytes += _LANES * np.dtype(x.dtype).itemsize
    budget_rows = _VMEM_BUDGET // (2 * row_bytes)
    max_rows = max(_SUBLANE_ALIGN,
                   min(_MAX_TILE_ROWS,
                       (budget_rows // _SUBLANE_ALIGN) * _SUBLANE_ALIGN))
    tile_rows, num_tiles = _tile_plan(r, max_rows)

    ins, in_specs = [], []
    for x, fill in stacked:
        xs = _prep_stacked(x, fill, r)
        ins.append(xs)
        in_specs.append(pl.BlockSpec((xs.shape[0], tile_rows, _LANES),
                                     lambda i: (0, i, 0)))
    for x, fill in flat:
        ins.append(_prep_flat(x, fill, r))
        in_specs.append(pl.BlockSpec((tile_rows, _LANES), lambda i: (i, 0)))

    out = pl.pallas_call(
        kernel,
        out_shape=jax.ShapeDtypeStruct((r, _LANES), out_dtype),
        grid=(num_tiles,),
        in_specs=in_specs,
        out_specs=pl.BlockSpec((tile_rows, _LANES), lambda i: (i, 0)),
        compiler_params=pltpu.CompilerParams(
            dimension_semantics=("parallel",),   # shards row tiles across v7x TCs
            vmem_limit_bytes=_vmem_limit_bytes()),
    )(*ins)

    if r * _LANES == n_valid:                    # common case: free reshape
        return out.reshape(out_shape)
    return out.reshape(-1)[:n_valid].reshape(out_shape)


# ----------------------------------------------------------------------------
# Public sampling heads
# ----------------------------------------------------------------------------
def cmal_sample(mu_all, b_all, tau_all, choice, prob, *,
                min_pallas_elems=_SMALL_FALLBACK_ELEMS):
    """CMAL (and UMAL, which shares the ALD inverse CDF) sampling head.

    mu/b/tau_all: [n_dist, batch*n_samples, predict_last_n] f32.
    choice:       [batch*n_samples, predict_last_n] int (int8 preferred).
    prob:         same shape as choice, f32 U(0,1) draw.
    """
    n_dist = mu_all.shape[0]
    if prob.size < min_pallas_elems:
        # Launch + plumbing overhead dominates at small sizes; let XLA fuse.
        idx = choice[None].astype(jnp.int32)
        g = lambda x: jnp.take_along_axis(x, idx, axis=0)[0]
        return _cmal_icdf(g(mu_all), g(b_all), g(tau_all), prob)
    return _run_fused(
        functools.partial(_cmal_sample_kernel, n_dist),
        stacked=[(mu_all, 0.0), (b_all, 1.0), (tau_all, 0.5)],
        flat=[(choice, 0), (prob, 0.25)],
        n_valid=prob.size,
        out_shape=prob.shape,
    )


def gmm_sample(mu_all, sigma_all, choice, eps, *,
               min_pallas_elems=_SMALL_FALLBACK_ELEMS):
    """GMM sampling head.

    mu/sigma_all: [n_dist, batch*n_samples, predict_last_n] f32.
    choice:       [batch*n_samples, predict_last_n] int (int8 preferred).
    eps:          same shape as choice, f32 N(0,1) draw.
    """
    n_dist = mu_all.shape[0]
    if eps.size < min_pallas_elems:
        idx = choice[None].astype(jnp.int32)
        g = lambda x: jnp.take_along_axis(x, idx, axis=0)[0]
        return _gmm_transform(g(mu_all), g(sigma_all), eps)
    return _run_fused(
        functools.partial(_gmm_sample_kernel, n_dist),
        stacked=[(mu_all, 0.0), (sigma_all, 1.0)],
        flat=[(choice, 0), (eps, 0.0)],
        n_valid=eps.size,
        out_shape=eps.shape,
    )


# ----------------------------------------------------------------------------
# Pure-JAX references (original two-branch formulation, host-side gather)
# ----------------------------------------------------------------------------
def _cmal_ref(mu_all, b_all, tau_all, choice, prob):
    idx = choice[None].astype(jnp.int32)
    g = lambda x: jnp.take_along_axis(x, idx, axis=0)[0]
    mu, b, tau = g(mu_all), g(b_all), g(tau_all)
    left = mu + b * jnp.log(prob / tau) / (1.0 - tau)
    right = mu - b * jnp.log((1.0 - prob) / (1.0 - tau)) / tau
    return jnp.maximum(jnp.where(prob < tau, left, right), 0.0)


def _gmm_ref(mu_all, sigma_all, choice, eps):
    idx = choice[None].astype(jnp.int32)
    g = lambda x: jnp.take_along_axis(x, idx, axis=0)[0]
    return jnp.maximum(g(mu_all) + g(sigma_all) * eps, 0.0)


# ----------------------------------------------------------------------------
# Main
# ----------------------------------------------------------------------------
if __name__ == "__main__":
    # "cfg"-style synthetic settings (BaseModel.__init__ shape logic):
    #   target_variables -> 1, head='cmal', n_distributions=3
    #   output_size = 1 * 4 * 3 = 12   (mu, b, tau, pi per distribution)
    batch = 8
    n_samples = 16
    predict_last_n = 8
    n_distributions = 3
    rows = batch * n_samples        # torch.repeat_interleave(n_samples, dim=0)

    key = jax.random.PRNGKey(0)
    k_mu, k_b, k_tau, k_pi, k_choice, k_prob, k_sigma, k_eps = jax.random.split(key, 8)

    # Head outputs in distribution-major layout [n_dist, rows, predict_last_n]
    # (the layout the fused kernel consumes; a cheap transpose in a real model).
    shape3 = (n_distributions, rows, predict_last_n)
    mu_all = jax.random.normal(k_mu, shape3, dtype=jnp.float32)
    b_all = jax.nn.softplus(jax.random.normal(k_b, shape3, dtype=jnp.float32))
    tau_all = jax.nn.sigmoid(jax.random.normal(k_tau, shape3, dtype=jnp.float32))
    logits = jax.random.normal(k_pi, shape3, dtype=jnp.float32)

    # torch.multinomial(pi) equivalent: categorical sample over the mixture
    # axis; cast to int8 at the sampling site (fuses into the sampling op, and
    # quarters the HBM traffic of the choice plane inside the kernel).
    choice = jax.random.categorical(k_choice, logits, axis=0).astype(jnp.int8)
    prob = jax.random.uniform(k_prob, (rows, predict_last_n), dtype=jnp.float32,
                              minval=1e-4, maxval=1.0 - 1e-4)

    # ----- CMAL head (Pallas path forced; demo sizes are below the fallback) --
    y_cmal = jax.block_until_ready(
        cmal_sample(mu_all, b_all, tau_all, choice, prob, min_pallas_elems=0))
    ref_cmal = _cmal_ref(mu_all, b_all, tau_all, choice, prob)
    assert y_cmal.shape == (rows, predict_last_n)
    assert jnp.allclose(y_cmal, ref_cmal, atol=1e-3, rtol=1e-4), \
        float(jnp.max(jnp.abs(y_cmal - ref_cmal)))

    # Small-size jnp fallback must agree with the kernel path.
    y_cmal_fb = cmal_sample(mu_all, b_all, tau_all, choice, prob)
    assert jnp.allclose(y_cmal_fb, y_cmal, atol=1e-5, rtol=1e-5)

    # Unaligned case (n_valid % 128 != 0): exercises the 128-lane pad + slice.
    rows_u = 100
    y_cmal_u = jax.block_until_ready(
        cmal_sample(mu_all[:, :rows_u], b_all[:, :rows_u], tau_all[:, :rows_u],
                    choice[:rows_u], prob[:rows_u], min_pallas_elems=0))
    ref_cmal_u = _cmal_ref(mu_all[:, :rows_u], b_all[:, :rows_u],
                           tau_all[:, :rows_u], choice[:rows_u], prob[:rows_u])
    assert y_cmal_u.shape == (rows_u, predict_last_n)
    assert jnp.allclose(y_cmal_u, ref_cmal_u, atol=1e-3, rtol=1e-4)

    # BaseModel.sample_cmal output convention: values.view(-1, predict_last_n, n_samples)
    y_hat_cmal = y_cmal.reshape(-1, predict_last_n, n_samples)
    assert y_hat_cmal.shape == (batch, predict_last_n, n_samples)

    # ----- GMM head ----------------------------------------------------------
    sigma_all = jax.nn.softplus(jax.random.normal(k_sigma, shape3, dtype=jnp.float32))
    eps = jax.random.normal(k_eps, (rows, predict_last_n), dtype=jnp.float32)

    y_gmm = jax.block_until_ready(
        gmm_sample(mu_all, sigma_all, choice, eps, min_pallas_elems=0))
    ref_gmm = _gmm_ref(mu_all, sigma_all, choice, eps)
    assert y_gmm.shape == (rows, predict_last_n)
    assert jnp.allclose(y_gmm, ref_gmm, atol=1e-5, rtol=1e-5)

    print("KERNEL_OK")
</pallas_src>

<mosaic_0001>
module attributes {stable_mosaic.version = 11 : i64} {
  func.func @_cmal_sample_kernel(%arg0: i32, %arg1: memref<3x8x128xf32, #tpu.memory_space<vmem>>, %arg2: memref<3x8x128xf32, #tpu.memory_space<vmem>>, %arg3: memref<3x8x128xf32, #tpu.memory_space<vmem>>, %arg4: memref<8x128xi8, #tpu.memory_space<vmem>>, %arg5: memref<8x128xf32, #tpu.memory_space<vmem>>, %arg6: memref<8x128xf32, #tpu.memory_space<vmem>>) attributes {dimension_semantics = [#tpu.dimension_semantics<parallel>], iteration_bounds = array<i64: 1>, scalar_prefetch = 0 : i64, scratch_operands = 0 : i64, tpu.core_type = #tpu.core_type<tc>, window_params = [{transform_indices = @transform_0, window_bounds = array<i64: 3, 8, 128>}, {transform_indices = @transform_1, window_bounds = array<i64: 3, 8, 128>}, {transform_indices = @transform_2, window_bounds = array<i64: 3, 8, 128>}, {transform_indices = @transform_3, window_bounds = array<i64: 8, 128>}, {transform_indices = @transform_4, window_bounds = array<i64: 8, 128>}, {transform_indices = @transform_5, window_bounds = array<i64: 8, 128>}]} {
    %c0 = arith.constant 0 : index
    %c0_0 = arith.constant 0 : index
    %0 = vector.load %arg4[%c0, %c0_0] : memref<8x128xi8, #tpu.memory_space<vmem>>, vector<8x128xi8>
    %1 = arith.extsi %0 : vector<8x128xi8> to vector<8x128xi32>
    %c0_1 = arith.constant 0 : index
    %c0_2 = arith.constant 0 : index
    %c0_3 = arith.constant 0 : index
    %2 = vector.load %arg1[%c0_1, %c0_2, %c0_3] : memref<3x8x128xf32, #tpu.memory_space<vmem>>, vector<1x8x128xf32>
    %3 = vector.shape_cast %2 : vector<1x8x128xf32> to vector<8x128xf32>
    %c0_4 = arith.constant 0 : index
    %c0_5 = arith.constant 0 : index
    %c0_6 = arith.constant 0 : index
    %4 = vector.load %arg2[%c0_4, %c0_5, %c0_6] : memref<3x8x128xf32, #tpu.memory_space<vmem>>, vector<1x8x128xf32>
    %5 = vector.shape_cast %4 : vector<1x8x128xf32> to vector<8x128xf32>
    %c0_7 = arith.constant 0 : index
    %c0_8 = arith.constant 0 : index
    %c0_9 = arith.constant 0 : index
    %6 = vector.load %arg3[%c0_7, %c0_8, %c0_9] : memref<3x8x128xf32, #tpu.memory_space<vmem>>, vector<1x8x128xf32>
    %7 = vector.shape_cast %6 : vector<1x8x128xf32> to vector<8x128xf32>
    %c1_i32 = arith.constant 1 : i32
    %8 = vector.broadcast %c1_i32 : i32 to vector<8x128xi32>
    %9 = arith.cmpi eq, %1, %8 : vector<8x128xi32>
    %c1 = arith.constant 1 : index
    %c0_10 = arith.constant 0 : index
    %c0_11 = arith.constant 0 : index
    %10 = vector.load %arg1[%c1, %c0_10, %c0_11] : memref<3x8x128xf32, #tpu.memory_space<vmem>>, vector<1x8x128xf32>
    %11 = vector.shape_cast %10 : vector<1x8x128xf32> to vector<8x128xf32>
    %12 = arith.select %9, %11, %3 : vector<8x128xi1>, vector<8x128xf32>
    %c1_12 = arith.constant 1 : index
    %c0_13 = arith.constant 0 : index
    %c0_14 = arith.constant 0 : index
    %13 = vector.load %arg2[%c1_12, %c0_13, %c0_14] : memref<3x8x128xf32, #tpu.memory_space<vmem>>, vector<1x8x128xf32>
    %14 = vector.shape_cast %13 : vector<1x8x128xf32> to vector<8x128xf32>
    %15 = arith.select %9, %14, %5 : vector<8x128xi1>, vector<8x128xf32>
    %c1_15 = arith.constant 1 : index
    %c0_16 = arith.constant 0 : index
    %c0_17 = arith.constant 0 : index
    %16 = vector.load %arg3[%c1_15, %c0_16, %c0_17] : memref<3x8x128xf32, #tpu.memory_space<vmem>>, vector<1x8x128xf32>
    %17 = vector.shape_cast %16 : vector<1x8x128xf32> to vector<8x128xf32>
    %18 = arith.select %9, %17, %7 : vector<8x128xi1>, vector<8x128xf32>
    %c2_i32 = arith.constant 2 : i32
    %19 = vector.broadcast %c2_i32 : i32 to vector<8x128xi32>
    %20 = arith.cmpi eq, %1, %19 : vector<8x128xi32>
    %c2 = arith.constant 2 : index
    %c0_18 = arith.constant 0 : index
    %c0_19 = arith.constant 0 : index
    %21 = vector.load %arg1[%c2, %c0_18, %c0_19] : memref<3x8x128xf32, #tpu.memory_space<vmem>>, vector<1x8x128xf32>
    %22 = vector.shape_cast %21 : vector<1x8x128xf32> to vector<8x128xf32>
    %23 = arith.select %20, %22, %12 : vector<8x128xi1>, vector<8x128xf32>
    %c2_20 = arith.constant 2 : index
    %c0_21 = arith.constant 0 : index
    %c0_22 = arith.constant 0 : index
    %24 = vector.load %arg2[%c2_20, %c0_21, %c0_22] : memref<3x8x128xf32, #tpu.memory_space<vmem>>, vector<1x8x128xf32>
    %25 = vector.shape_cast %24 : vector<1x8x128xf32> to vector<8x128xf32>
    %26 = arith.select %20, %25, %15 : vector<8x128xi1>, vector<8x128xf32>
    %c2_23 = arith.constant 2 : index
    %c0_24 = arith.constant 0 : index
    %c0_25 = arith.constant 0 : index
    %27 = vector.load %arg3[%c2_23, %c0_24, %c0_25] : memref<3x8x128xf32, #tpu.memory_space<vmem>>, vector<1x8x128xf32>
    %28 = vector.shape_cast %27 : vector<1x8x128xf32> to vector<8x128xf32>
    %29 = arith.select %20, %28, %18 : vector<8x128xi1>, vector<8x128xf32>
    %c0_26 = arith.constant 0 : index
    %c0_27 = arith.constant 0 : index
    %30 = vector.load %arg5[%c0_26, %c0_27] : memref<8x128xf32, #tpu.memory_space<vmem>>, vector<8x128xf32>
    %cst = arith.constant 9.99999997E-7 : f32
    %cst_28 = arith.constant 0.999998986 : f32
    %31 = vector.broadcast %cst : f32 to vector<8x128xf32>
    %32 = arith.maximumf %31, %29 : vector<8x128xf32>
    %33 = vector.broadcast %cst_28 : f32 to vector<8x128xf32>
    %34 = arith.minimumf %33, %32 : vector<8x128xf32>
    %cst_29 = arith.constant 1.000000e+00 : f32
    %35 = vector.broadcast %cst_29 : f32 to vector<8x128xf32>
    %36 = arith.divf %35, %34 : vector<8x128xf32>
    %cst_30 = arith.constant 1.000000e+00 : f32
    %37 = vector.broadcast %cst_30 : f32 to vector<8x128xf32>
    %38 = arith.subf %37, %34 : vector<8x128xf32>
    %cst_31 = arith.constant 1.000000e+00 : f32
    %39 = vector.broadcast %cst_31 : f32 to vector<8x128xf32>
    %40 = arith.divf %39, %38 : vector<8x128xf32>
    %41 = arith.cmpf olt, %30, %34 : vector<8x128xf32>
    %42 = arith.mulf %30, %36 : vector<8x128xf32>
    %cst_32 = arith.constant 1.000000e+00 : f32
    %43 = vector.broadcast %cst_32 : f32 to vector<8x128xf32>
    %44 = arith.subf %43, %30 : vector<8x128xf32>
    %45 = arith.mulf %44, %40 : vector<8x128xf32>
    %46 = arith.select %41, %42, %45 : vector<8x128xi1>, vector<8x128xf32>
    %47 = arith.mulf %26, %40 : vector<8x128xf32>
    %cst_33 = arith.constant 0.000000e+00 : f32
    %48 = vector.broadcast %cst_33 : f32 to vector<8x128xf32>
    %49 = arith.subf %48, %26 : vector<8x128xf32>
    %50 = arith.mulf %49, %36 : vector<8x128xf32>
    %51 = arith.select %41, %47, %50 : vector<8x128xi1>, vector<8x128xf32>
    %52 = math.log %46 : vector<8x128xf32>
    %53 = arith.mulf %51, %52 : vector<8x128xf32>
    %54 = arith.addf %23, %53 : vector<8x128xf32>
    %cst_34 = arith.constant 0.000000e+00 : f32
    %55 = vector.broadcast %cst_34 : f32 to vector<8x128xf32>
    %56 = arith.maximumf %54, %55 : vector<8x128xf32>
    %c0_35 = arith.constant 0 : index
    %c0_36 = arith.constant 0 : index
    %57 = vector.load %arg6[%c0_35, %c0_36] : memref<8x128xf32, #tpu.memory_space<vmem>>, vector<8x128xf32>
    tpu.vector_store %arg6[%c0_35, %c0_36], %56 {strides = array<i32>} : memref<8x128xf32, #tpu.memory_space<vmem>>, vector<8x128xf32>,
    return
  }
  func.func @transform_0(%arg0: i32) -> (i32, i32, i32) {
    %c0_i32 = arith.constant 0 : i32
    %c0_i32_0 = arith.constant 0 : i32
    %c0_i32_1 = arith.constant 0 : i32
    return %c0_i32, %arg0, %c0_i32_0 : i32, i32, i32
  }
  func.func @transform_1(%arg0: i32) -> (i32, i32, i32) {
    %c0_i32 = arith.constant 0 : i32
    %c0_i32_0 = arith.constant 0 : i32
    %c0_i32_1 = arith.constant 0 : i32
    return %c0_i32, %arg0, %c0_i32_0 : i32, i32, i32
  }
  func.func @transform_2(%arg0: i32) -> (i32, i32, i32) {
    %c0_i32 = arith.constant 0 : i32
    %c0_i32_0 = arith.constant 0 : i32
    %c0_i32_1 = arith.constant 0 : i32
    return %c0_i32, %arg0, %c0_i32_0 : i32, i32, i32
  }
  func.func @transform_3(%arg0: i32) -> (i32, i32) {
    %c0_i32 = arith.constant 0 : i32
    %c0_i32_0 = arith.constant 0 : i32
    return %arg0, %c0_i32 : i32, i32
  }
  func.func @transform_4(%arg0: i32) -> (i32, i32) {
    %c0_i32 = arith.constant 0 : i32
    %c0_i32_0 = arith.constant 0 : i32
    return %arg0, %c0_i32 : i32, i32
  }
  func.func @transform_5(%arg0: i32) -> (i32, i32) {
    %c0_i32 = arith.constant 0 : i32
    %c0_i32_0 = arith.constant 0 : i32
    return %arg0, %c0_i32 : i32, i32
  }
}

</mosaic_0001>

<llo_original>
// kernel: tpu_custom_call.1
$region0: #{tpu_custom_call.1}
  #allocation0 [shape = 'u32[]', space=smem, size = 0x4, offset = 0x4, fixed_abs, tag = 'smem constant byte address 0x4 - core index']
  #allocation1 [shape = 'u32[144,128]{1,0:T(1,128)}', space=vmem, size = 0x12000, scoped, tag = 'internal scratch']
  %s0 = inlined_call_operand.hbm [shape: f32[3,8,128], index: 0, kind: input, shape index: {}]
  %s1 = inlined_call_operand.hbm [shape: f32[3,8,128], index: 1, kind: input, shape index: {}]
  %s2 = inlined_call_operand.hbm [shape: f32[3,8,128], index: 2, kind: input, shape index: {}]
  %s3 = inlined_call_operand.vmem [shape: s8[8,128], index: 3, kind: input, shape index: {}]
  %s4 = inlined_call_operand.vmem [shape: f32[8,128], index: 4, kind: input, shape index: {}]
  %s5 = inlined_call_operand.hbm [shape: f32[8,128], index: 5, kind: output, shape index: {}]
  %s6 = sld [smem:[#allocation0]]
  $region42: #{tpu_custom_call.1} parent=0
    _
  %s8 = ssub.s32 1, %s6
  %s9 = scalar_select 0, %s8, %s6
  $region1: #{tpu_custom_call.1} parent=0
    #allocation2 [shape = 'u8[12288]{0}', space=vmem, size = 0x3000, scoped, tag = 'input window, operand 0, single buffered']
    #allocation3 [shape = 's32[1]{0}', space=sflag, size = 0x4, scoped, tag = 'scoped memory for tpu_custom_call.1']
    #allocation4 [shape = 's32[1]{0}', space=sflag, size = 0x4, scoped, tag = 'scoped memory for tpu_custom_call.1']
    #allocation5 [shape = 'u8[12288]{0}', space=vmem, size = 0x3000, scoped, tag = 'input window, operand 1, single buffered']
    #allocation6 [shape = 's32[1]{0}', space=sflag, size = 0x4, scoped, tag = 'scoped memory for tpu_custom_call.1']
    #allocation7 [shape = 'u8[12288]{0}', space=vmem, size = 0x3000, scoped, tag = 'input window, operand 2, single buffered']
    #allocation8 [shape = 'u8[4096]{0}', space=vmem, size = 0x1000, scoped, tag = 'output window, operand 0, single buffered']
    %10 = vsyncpa [#allocation3], 0
    %11 = vsyncpa [#allocation6], 0
    %12 = vsyncpa [#allocation4], 0
    // Predicated region
    $region2: #{tpu_custom_call.1} parent=1 // pred_check
      _
    $region3: #{tpu_custom_call.1} parent=1 // pred_check_branch
      %14 = sbr.rel (0) target = $region5
    $region4: #{tpu_custom_call.1} parent=1 // pred_region
      %s16 = ssub.s32 384, 384
      %17 = vsyncadd [#allocation3], %s16
      %s18 = sshll.u32 [#allocation2], 4
      %s19 = int_to_ptr.vmem [resolvable:$true] %s18
      %24 = dma.hbm_to_vmem [thread:$0]  %s0, 384, %s19, [#allocation3], 128, 128, 8
    $region5: #{tpu_custom_call.1} parent=1 // pred_fallthru
      _
    // Predicated region
    $region6: #{tpu_custom_call.1} parent=1 // pred_check
      _
    $region7: #{tpu_custom_call.1} parent=1 // pred_check_branch
      %26 = sbr.rel (0) target = $region9
    $region8: #{tpu_custom_call.1} parent=1 // pred_region
      %s28 = ssub.s32 384, 384
      %29 = vsyncadd [#allocation6], %s28
      %s30 = sshll.u32 [#allocation5], 4
      %s31 = int_to_ptr.vmem [resolvable:$true] %s30
      %36 = dma.hbm_to_vmem [thread:$0]  %s1, 384, %s31, [#allocation6], 128, 128, 8
    $region9: #{tpu_custom_call.1} parent=1 // pred_fallthru
      _
    // Predicated region
    $region10: #{tpu_custom_call.1} parent=1 // pred_check
      _
    $region11: #{tpu_custom_call.1} parent=1 // pred_check_branch
      %38 = sbr.rel (0) target = $region13
    $region12: #{tpu_custom_call.1} parent=1 // pred_region
      %s40 = ssub.s32 384, 384
      %41 = vsyncadd [#allocation6], %s40
      %s42 = sshll.u32 [#allocation7], 4
      %s43 = int_to_ptr.vmem [resolvable:$true] %s42
      %48 = dma.hbm_to_vmem [thread:$0]  %s2, 384, %s43, [#allocation6], 128, 128, 8
    $region13: #{tpu_custom_call.1} parent=1 // pred_fallthru
      _
    // Predicated region
    $region14: #{tpu_custom_call.1} parent=1 // pred_check
      _
    $region15: #{tpu_custom_call.1} parent=1 // pred_check_branch
      %50 = sbr.rel (0) target = $region17
    $region16: #{tpu_custom_call.1} parent=1 // pred_region
      _
    $region17: #{tpu_custom_call.1} parent=1 // pred_fallthru
      _
    // Predicated region
    $region18: #{tpu_custom_call.1} parent=1 // pred_check
      _
    $region19: #{tpu_custom_call.1} parent=1 // pred_check_branch
      %52 = sbr.rel (0) target = $region21
    $region20: #{tpu_custom_call.1} parent=1 // pred_region
      _
    $region21: #{tpu_custom_call.1} parent=1 // pred_fallthru
      _
    // Predicated region
    $region22: #{tpu_custom_call.1} parent=1 // pred_check
      _
    $region23: #{tpu_custom_call.1} parent=1 // pred_check_branch
      %54 = sbr.rel (0) target = $region25
    $region24: #{tpu_custom_call.1} parent=1 // pred_region
      %55 = dma.done [#allocation3], 384
    $region25: #{tpu_custom_call.1} parent=1 // pred_fallthru
      _
    // Predicated region
    $region26: #{tpu_custom_call.1} parent=1 // pred_check
      _
    $region27: #{tpu_custom_call.1} parent=1 // pred_check_branch
      %57 = sbr.rel (0) target = $region29
    $region28: #{tpu_custom_call.1} parent=1 // pred_region
      %58 = dma.done [#allocation6], 384
    $region29: #{tpu_custom_call.1} parent=1 // pred_fallthru
      _
    // Predicated region
    $region30: #{tpu_custom_call.1} parent=1 // pred_check
      _
    $region31: #{tpu_custom_call.1} parent=1 // pred_check_branch
      %60 = sbr.rel (0) target = $region33
    $region32: #{tpu_custom_call.1} parent=1 // pred_region
      %61 = dma.done [#allocation6], 384
    $region33: #{tpu_custom_call.1} parent=1 // pred_fallthru
      _
    %v62 = vld [vmem:[%s3] sm:$0x3]
    %v63 = vunpack.c.0.s8 %v62
    %v64 = vld [vmem:[#allocation2] sm:$0xff]
    %v65 = vld [vmem:[#allocation5] sm:$0xff]
    %v66 = vld [vmem:[#allocation7] sm:$0xff]
    %vm67 = vcmp.eq.s32.totalorder %v63, 1
    %s68 = scalar_lea.vmem [#allocation2], 8
    %v69 = vld [vmem:[%s68] sm:$0xff]
    %v70 = vsel %vm67, %v69, %v64
    %s71 = scalar_lea.vmem [#allocation5], 8
    %v72 = vld [vmem:[%s71] sm:$0xff]
    %v73 = vsel %vm67, %v72, %v65
    %s74 = scalar_lea.vmem [#allocation7], 8
    %v75 = vld [vmem:[%s74] sm:$0xff]
    %v76 = vsel %vm67, %v75, %v66
    %vm77 = vcmp.eq.s32.totalorder %v63, 2
    %s78 = scalar_lea.vmem [#allocation2], 16
    %v79 = vld [vmem:[%s78] sm:$0xff]
    %v80 = vsel %vm77, %v79, %v70
    %s81 = scalar_lea.vmem [#allocation5], 16
    %v82 = vld [vmem:[%s81] sm:$0xff]
    %v83 = vsel %vm77, %v82, %v73
    %s84 = scalar_lea.vmem [#allocation7], 16
    %v85 = vld [vmem:[%s84] sm:$0xff]
    %v86 = vsel %vm77, %v85, %v76
    %v87 = vld [vmem:[%s4] sm:$0xff]
    %v88 = vmax.f32 %v86, 1e-06
    %v89 = vmin.f32 %v88, 0.999999
    %v90 = vrcp.pop %v89
    %v91 = vmul.f32 1.0, %v90
    %v92 = vsub.f32 1.0, %v89
    %v93 = vrcp.pop %v92
    %v94 = vmul.f32 1.0, %v93
    %vm95 = vcmp.lt.f32.partialorder %v87, %v89
    %v96 = vmul.f32 %v87, %v91
    %v97 = vsub.f32 1.0, %v87
    %v98 = vmul.f32 %v97, %v94
    %v99 = vsel %vm95, %v96, %v98
    %v100 = vmul.f32 %v83, %v94
    %v101 = vsub.f32 0.0, %v83
    %v102 = vmul.f32 %v101, %v91
    %v103 = vsel %vm95, %v100, %v102
    %v104 = vlog2.pop %v99
    %v105 = vmul.f32 %v104, 0.6931472
    %v106 = vmul.f32 %v103, %v105
    %v107 = vadd.f32 %v80, %v106
    %v108 = vmax.f32 %v107, 0.0
    %109 = vst [vmem:[#allocation8] sm:$0xff] %v108
    // Predicated region
    $region34: #{tpu_custom_call.1} parent=1 // pred_check
      _
    $region35: #{tpu_custom_call.1} parent=1 // pred_check_branch
      %111 = sbr.rel (0) target = $region37
    $region36: #{tpu_custom_call.1} parent=1 // pred_region
      %s113 = ssub.s32 128, 128
      %114 = vsyncadd [#allocation4], %s113
      %s116 = sshll.u32 [#allocation8], 4
      %s117 = int_to_ptr.vmem [resolvable:$true] %s116
      %119 = dma.vmem_to_hbm [thread:$0]  %s117, 128, %s5, [#allocation4]
    $region37: #{tpu_custom_call.1} parent=1 // pred_fallthru
      _
    // Predicated region
    $region38: #{tpu_custom_call.1} parent=1 // pred_check
      _
    $region39: #{tpu_custom_call.1} parent=1 // pred_check_branch
      %121 = sbr.rel (0) target = $region41
    $region40: #{tpu_custom_call.1} parent=1 // pred_region
      %122 = dma.done [#allocation4], 128
    $region41: #{tpu_custom_call.1} parent=1 // pred_fallthru
      _
    %123 = vsyncpa [#allocation3], 1
    %124 = vsyncpa [#allocation6], 1
    %125 = vsyncpa [#allocation4], 1

</llo_original>
